<compile_context>
chip_gen: v7x
topology: tpu7x:2x2x1
jax: 0.10.0
libtpu: 0.0.40
codegen_flags: <defaults>
</compile_context>

<pallas_src>
import jax
import jax.numpy as jnp
from jax.experimental import pallas as pl
from jax.experimental.pallas import tpu as pltpu


def _round_up(n, m):
    return ((n + m - 1) // m) * m


def _cdiv(a, b):
    return (a + b - 1) // b


_TILE_CAP = 2048  # rows per batch tile; VMEM use at this size is ~1 MiB


# ---------------------------------------------------------------------------
# Kernel
# ---------------------------------------------------------------------------
def _graph_linear_kernel(x_ref, w0_ref, w1_ref, w2_ref, w3f_ref,
                         bh_ref, bf_ref, out_ref):
    """One batch tile: 3 ReLU layers -> fused (layer4 @ classifier) -> log_softmax.

    Matmul operands are bf16; accumulation, bias, ReLU, log_softmax in f32.
    """
    def mm(h_bf16, w_ref):
        return jnp.dot(h_bf16, w_ref[...], preferred_element_type=jnp.float32)

    x = x_ref[...]                                          # bf16 (tile_m, in)
    h = jnp.maximum(mm(x, w0_ref) + bh_ref[0:1, :], 0.0)    # (tile_m, 2H) f32
    h = jnp.maximum(mm(h.astype(jnp.bfloat16), w1_ref) + bh_ref[1:2, :], 0.0)
    h = jnp.maximum(mm(h.astype(jnp.bfloat16), w2_ref) + bh_ref[2:3, :], 0.0)
    # Layer 4 (no ReLU) fused into the classifier weight: w3f = W3 @ Wf.
    logits = mm(h.astype(jnp.bfloat16), w3f_ref) + bf_ref[...]   # (tile_m, out)

    # log_softmax over the feature dim (f32).
    m = jnp.max(logits, axis=1, keepdims=True)
    z = logits - m
    lse = jnp.log(jnp.sum(jnp.exp(z), axis=1, keepdims=True))
    out_ref[...] = (z - lse).astype(out_ref.dtype)


# ---------------------------------------------------------------------------
# Wrapper
# ---------------------------------------------------------------------------
def _choose_tiling(n):
    """Adaptive batch tiling: >=2 grid steps when possible, <=_TILE_CAP rows."""
    n8 = _round_up(n, 8)
    if n8 <= 8:
        return n8, 1
    steps = max(2, _cdiv(n8, _TILE_CAP))
    tile = _round_up(_cdiv(n, steps), 8)
    return tile, steps


@jax.jit
def custom_graph_linear_forward(x, merged_params):
    """x: (N, in_channels) f32.  merged_params: (w0, w1, w2, w3f, bh, bf)."""
    w0, w1, w2, w3f, bh, bf = merged_params
    n, in_ch = x.shape
    two_h = w0.shape[1]
    out_ch = w3f.shape[1]

    tile_m, steps = _choose_tiling(n)
    n_pad = tile_m * steps

    x = x.astype(jnp.bfloat16)
    if n_pad != n:
        x = jnp.pad(x, ((0, n_pad - n), (0, 0)))

    def resident(arr):
        # Full-array block, same block index every grid step -> stays in VMEM.
        return pl.BlockSpec(arr.shape, lambda i: (0,) * arr.ndim)

    # Advisory cost: dense matmuls actually issued on the MXU (post-fusion),
    # exp per logit + one log per row, bf16 x/weights + f32 out/bias traffic.
    mm_elems = in_ch * two_h + 2 * two_h * two_h + two_h * out_ch
    cost = pl.CostEstimate(
        flops=2 * n_pad * mm_elems,
        transcendentals=n_pad * (out_ch + 1),
        bytes_accessed=(2 * n_pad * in_ch + 4 * n_pad * out_ch
                        + 2 * mm_elems + 4 * (3 * two_h + out_ch)),
    )

    out = pl.pallas_call(
        _graph_linear_kernel,
        out_shape=jax.ShapeDtypeStruct((n_pad, out_ch), jnp.float32),
        grid=(steps,),
        in_specs=[
            pl.BlockSpec((tile_m, in_ch), lambda i: (i, 0)),   # x: pipelined
            resident(w0), resident(w1), resident(w2), resident(w3f),
            resident(bh), resident(bf),
        ],
        out_specs=pl.BlockSpec((tile_m, out_ch), lambda i: (i, 0)),
        compiler_params=pltpu.CompilerParams(
            dimension_semantics=("parallel",),      # shards steps across v7x TCs
        ),
        cost_estimate=cost,
    )(x, w0, w1, w2, w3f, bh, bf)

    return out[:n] if n_pad != n else out


# ---------------------------------------------------------------------------
# Parameter construction / merging (wrapper-side, one-time).
# ---------------------------------------------------------------------------
def _init_linear(key, fan_in, fan_out):
    """Mimics nn.Linear default init; weight stored pre-transposed (in, out)."""
    kw, kb = jax.random.split(key)
    bound = 1.0 / jnp.sqrt(fan_in)
    w = jax.random.uniform(kw, (fan_in, fan_out), jnp.float32, -bound, bound)
    b = jax.random.uniform(kb, (1, fan_out), jnp.float32, -bound, bound)
    return w, b


def init_params(key, in_channels, hidden_channels, out_channels):
    keys = jax.random.split(key, 9)
    params = []
    dims = [(in_channels, hidden_channels)] + [(hidden_channels, hidden_channels)] * 3
    for k, (fi, fo) in zip(keys[0:4], dims):      # chain 1
        params.extend(_init_linear(k, fi, fo))
    for k, (fi, fo) in zip(keys[4:8], dims):      # chain 2
        params.extend(_init_linear(k, fi, fo))
    params.extend(_init_linear(keys[8], 2 * hidden_channels, out_channels))
    return tuple(params)


def merge_params(params):
    """Fuse the two chains (block-diagonal) and fold layer 4 into the classifier."""
    (w10, b10, w11, b11, w12, b12, w13, b13,
     w20, b20, w21, b21, w22, b22, w23, b23, wf, bf) = params
    h = w10.shape[1]
    z = jnp.zeros((h, h), jnp.float32)

    def blkdiag(a, b):
        return jnp.block([[a, z], [z, b]])

    w0 = jnp.concatenate([w10, w20], axis=1)          # (in, 2H)
    w1 = blkdiag(w11, w21)                            # (2H, 2H)
    w2 = blkdiag(w12, w22)                            # (2H, 2H)
    w3 = blkdiag(w13, w23)                            # (2H, 2H)

    # Algebraic fusion (valid in eval mode: layer 4 has no ReLU/dropout after it).
    w3f = w3 @ wf                                     # (2H, out), f32
    b3 = jnp.concatenate([b13[0], b23[0]])            # (2H,)
    bf_fused = (b3 @ wf + bf[0])[None, :]             # (1, out), f32

    bh = jnp.stack([
        jnp.concatenate([b10[0], b20[0]]),
        jnp.concatenate([b11[0], b21[0]]),
        jnp.concatenate([b12[0], b22[0]]),
    ])                                                # (3, 2H), f32

    to_bf16 = lambda a: a.astype(jnp.bfloat16)
    return (to_bf16(w0), to_bf16(w1), to_bf16(w2), to_bf16(w3f), bh, bf_fused)


def _reference_forward(x, params):
    """Pure-JAX f32 reference matching the PyTorch module (eval mode)."""
    (w10, b10, w11, b11, w12, b12, w13, b13,
     w20, b20, w21, b21, w22, b22, w23, b23, wf, bf) = params
    relu = lambda h: jnp.maximum(h, 0.0)
    h1 = relu(x @ w10 + b10)
    h1 = relu(h1 @ w11 + b11)
    h1 = relu(h1 @ w12 + b12)
    h1 = h1 @ w13 + b13
    h2 = relu(x @ w20 + b20)
    h2 = relu(h2 @ w21 + b21)
    h2 = relu(h2 @ w22 + b22)
    h2 = h2 @ w23 + b23
    logits = jnp.concatenate([h1, h2], axis=1) @ wf + bf
    return jax.nn.log_softmax(logits, axis=1)


if __name__ == "__main__":
    in_channels, hidden_channels, out_channels = 16, 32, 8

    key = jax.random.PRNGKey(0)
    k_x, k_p = jax.random.split(key)
    params = init_params(k_p, in_channels, hidden_channels, out_channels)
    merged = merge_params(params)

    # batch=8: single-tile path; batch=20: padded tail + multi-step grid path.
    for batch in (8, 20):
        x = jax.random.normal(jax.random.fold_in(k_x, batch),
                              (batch, in_channels), jnp.float32)
        out = jax.block_until_ready(custom_graph_linear_forward(x, merged))
        ref = _reference_forward(x, params)
        assert out.shape == (batch, out_channels)
        # bf16 matmul operands -> relaxed tolerance vs. the f32 reference.
        assert jnp.allclose(out, ref, atol=5e-2, rtol=5e-2), (
            "max abs err", float(jnp.max(jnp.abs(out - ref))))
        assert bool(jnp.all(jnp.isfinite(out)))

    print("KERNEL_OK")
</pallas_src>

<mosaic_0001>
module attributes {stable_mosaic.version = 11 : i64} {
  func.func @_graph_linear_kernel(%arg0: i32, %arg1: memref<8x16xbf16, #tpu.memory_space<vmem>>, %arg2: memref<16x64xbf16, #tpu.memory_space<vmem>>, %arg3: memref<64x64xbf16, #tpu.memory_space<vmem>>, %arg4: memref<64x64xbf16, #tpu.memory_space<vmem>>, %arg5: memref<64x8xbf16, #tpu.memory_space<vmem>>, %arg6: memref<3x64xf32, #tpu.memory_space<vmem>>, %arg7: memref<1x8xf32, #tpu.memory_space<vmem>>, %arg8: memref<8x8xf32, #tpu.memory_space<vmem>>) attributes {dimension_semantics = [#tpu.dimension_semantics<parallel>], iteration_bounds = array<i64: 1>, scalar_prefetch = 0 : i64, scratch_operands = 0 : i64, tpu.core_type = #tpu.core_type<tc>, window_params = [{transform_indices = @transform_0, window_bounds = array<i64: 8, 16>}, {pipeline_mode = #tpu.pipeline_mode<synchronous>, transform_indices = @transform_1, window_bounds = array<i64: 16, 64>}, {pipeline_mode = #tpu.pipeline_mode<synchronous>, transform_indices = @transform_2, window_bounds = array<i64: 64, 64>}, {pipeline_mode = #tpu.pipeline_mode<synchronous>, transform_indices = @transform_3, window_bounds = array<i64: 64, 64>}, {pipeline_mode = #tpu.pipeline_mode<synchronous>, transform_indices = @transform_4, window_bounds = array<i64: 64, 8>}, {pipeline_mode = #tpu.pipeline_mode<synchronous>, transform_indices = @transform_5, window_bounds = array<i64: 3, 64>}, {pipeline_mode = #tpu.pipeline_mode<synchronous>, transform_indices = @transform_6, window_bounds = array<i64: 1, 8>}, {transform_indices = @transform_7, window_bounds = array<i64: 8, 8>}]} {
    %c0 = arith.constant 0 : index
    %c0_0 = arith.constant 0 : index
    %0 = vector.load %arg1[%c0, %c0_0] : memref<8x16xbf16, #tpu.memory_space<vmem>>, vector<8x16xbf16>
    %c0_1 = arith.constant 0 : index
    %c0_2 = arith.constant 0 : index
    %1 = vector.load %arg2[%c0_1, %c0_2] : memref<16x64xbf16, #tpu.memory_space<vmem>>, vector<16x64xbf16>
    %cst = arith.constant dense<0.000000e+00> : vector<8x64xf32>
    %2 = tpu.matmul %0, %1, %cst {dimension_numbers = #tpu.dot_dimension_numbers<[1], [0], [0], [1], [0, 0, 1, 1], [], []>} : vector<8x16xbf16>, vector<16x64xbf16>, vector<8x64xf32> -> vector<8x64xf32>
    %c0_3 = arith.constant 0 : index
    %c0_4 = arith.constant 0 : index
    %3 = vector.load %arg6[%c0_3, %c0_4] : memref<3x64xf32, #tpu.memory_space<vmem>>, vector<1x64xf32>
    %4 = vector.broadcast %3 : vector<1x64xf32> to vector<8x64xf32>
    %5 = arith.addf %2, %4 : vector<8x64xf32>
    %cst_5 = arith.constant 0.000000e+00 : f32
    %6 = vector.broadcast %cst_5 : f32 to vector<8x64xf32>
    %7 = arith.maximumf %5, %6 : vector<8x64xf32>
    %8 = arith.truncf %7 : vector<8x64xf32> to vector<8x64xbf16>
    %c0_6 = arith.constant 0 : index
    %c0_7 = arith.constant 0 : index
    %9 = vector.load %arg3[%c0_6, %c0_7] : memref<64x64xbf16, #tpu.memory_space<vmem>>, vector<64x64xbf16>
    %cst_8 = arith.constant dense<0.000000e+00> : vector<8x64xf32>
    %10 = tpu.matmul %8, %9, %cst_8 {dimension_numbers = #tpu.dot_dimension_numbers<[1], [0], [0], [1], [0, 0, 1, 1], [], []>} : vector<8x64xbf16>, vector<64x64xbf16>, vector<8x64xf32> -> vector<8x64xf32>
    %c1 = arith.constant 1 : index
    %c0_9 = arith.constant 0 : index
    %11 = vector.load %arg6[%c1, %c0_9] : memref<3x64xf32, #tpu.memory_space<vmem>>, vector<1x64xf32>
    %12 = vector.broadcast %11 : vector<1x64xf32> to vector<8x64xf32>
    %13 = arith.addf %10, %12 : vector<8x64xf32>
    %cst_10 = arith.constant 0.000000e+00 : f32
    %14 = vector.broadcast %cst_10 : f32 to vector<8x64xf32>
    %15 = arith.maximumf %13, %14 : vector<8x64xf32>
    %16 = arith.truncf %15 : vector<8x64xf32> to vector<8x64xbf16>
    %c0_11 = arith.constant 0 : index
    %c0_12 = arith.constant 0 : index
    %17 = vector.load %arg4[%c0_11, %c0_12] : memref<64x64xbf16, #tpu.memory_space<vmem>>, vector<64x64xbf16>
    %cst_13 = arith.constant dense<0.000000e+00> : vector<8x64xf32>
    %18 = tpu.matmul %16, %17, %cst_13 {dimension_numbers = #tpu.dot_dimension_numbers<[1], [0], [0], [1], [0, 0, 1, 1], [], []>} : vector<8x64xbf16>, vector<64x64xbf16>, vector<8x64xf32> -> vector<8x64xf32>
    %c2 = arith.constant 2 : index
    %c0_14 = arith.constant 0 : index
    %19 = vector.load %arg6[%c2, %c0_14] : memref<3x64xf32, #tpu.memory_space<vmem>>, vector<1x64xf32>
    %20 = vector.broadcast %19 : vector<1x64xf32> to vector<8x64xf32>
    %21 = arith.addf %18, %20 : vector<8x64xf32>
    %cst_15 = arith.constant 0.000000e+00 : f32
    %22 = vector.broadcast %cst_15 : f32 to vector<8x64xf32>
    %23 = arith.maximumf %21, %22 : vector<8x64xf32>
    %24 = arith.truncf %23 : vector<8x64xf32> to vector<8x64xbf16>
    %c0_16 = arith.constant 0 : index
    %c0_17 = arith.constant 0 : index
    %25 = vector.load %arg5[%c0_16, %c0_17] : memref<64x8xbf16, #tpu.memory_space<vmem>>, vector<64x8xbf16>
    %cst_18 = arith.constant dense<0.000000e+00> : vector<8x8xf32>
    %26 = tpu.matmul %24, %25, %cst_18 {dimension_numbers = #tpu.dot_dimension_numbers<[1], [0], [0], [1], [0, 0, 1, 1], [], []>} : vector<8x64xbf16>, vector<64x8xbf16>, vector<8x8xf32> -> vector<8x8xf32>
    %c0_19 = arith.constant 0 : index
    %c0_20 = arith.constant 0 : index
    %27 = vector.load %arg7[%c0_19, %c0_20] : memref<1x8xf32, #tpu.memory_space<vmem>>, vector<1x8xf32>
    %28 = vector.broadcast %27 : vector<1x8xf32> to vector<8x8xf32>
    %29 = arith.addf %26, %28 : vector<8x8xf32>
    %cst_21 = arith.constant dense<0xFF800000> : vector<8xf32>
    %30 = vector.multi_reduction <maximumf>, %29, %cst_21 [1] : vector<8x8xf32> to vector<8xf32>
    %31 = vector.shape_cast %30 : vector<8xf32> to vector<8x1xf32>
    %32 = vector.broadcast %31 : vector<8x1xf32> to vector<8x8xf32>
    %33 = arith.subf %29, %32 : vector<8x8xf32>
    %34 = math.exp %33 : vector<8x8xf32>
    %cst_22 = arith.constant dense<0.000000e+00> : vector<8xf32>
    %35 = vector.multi_reduction <add>, %34, %cst_22 [1] : vector<8x8xf32> to vector<8xf32>
    %36 = vector.shape_cast %35 : vector<8xf32> to vector<8x1xf32>
    %37 = math.log %36 : vector<8x1xf32>
    %38 = vector.broadcast %37 : vector<8x1xf32> to vector<8x8xf32>
    %39 = arith.subf %33, %38 : vector<8x8xf32>
    %c0_23 = arith.constant 0 : index
    %c0_24 = arith.constant 0 : index
    %40 = vector.load %arg8[%c0_23, %c0_24] : memref<8x8xf32, #tpu.memory_space<vmem>>, vector<8x8xf32>
    tpu.vector_store %arg8[%c0_23, %c0_24], %39 {strides = array<i32>} : memref<8x8xf32, #tpu.memory_space<vmem>>, vector<8x8xf32>,
    return
  }
  func.func @transform_0(%arg0: i32) -> (i32, i32) {
    %c0_i32 = arith.constant 0 : i32
    %c0_i32_0 = arith.constant 0 : i32
    return %arg0, %c0_i32 : i32, i32
  }
  func.func @transform_1(%arg0: i32) -> (i32, i32) {
    %c0_i32 = arith.constant 0 : i32
    %c0_i32_0 = arith.constant 0 : i32
    %c0_i32_1 = arith.constant 0 : i32
    return %c0_i32, %c0_i32_0 : i32, i32
  }
  func.func @transform_2(%arg0: i32) -> (i32, i32) {
    %c0_i32 = arith.constant 0 : i32
    %c0_i32_0 = arith.constant 0 : i32
    %c0_i32_1 = arith.constant 0 : i32
    return %c0_i32, %c0_i32_0 : i32, i32
  }
  func.func @transform_3(%arg0: i32) -> (i32, i32) {
    %c0_i32 = arith.constant 0 : i32
    %c0_i32_0 = arith.constant 0 : i32
    %c0_i32_1 = arith.constant 0 : i32
    return %c0_i32, %c0_i32_0 : i32, i32
  }
  func.func @transform_4(%arg0: i32) -> (i32, i32) {
    %c0_i32 = arith.constant 0 : i32
    %c0_i32_0 = arith.constant 0 : i32
    %c0_i32_1 = arith.constant 0 : i32
    return %c0_i32, %c0_i32_0 : i32, i32
  }
  func.func @transform_5(%arg0: i32) -> (i32, i32) {
    %c0_i32 = arith.constant 0 : i32
    %c0_i32_0 = arith.constant 0 : i32
    %c0_i32_1 = arith.constant 0 : i32
    return %c0_i32, %c0_i32_0 : i32, i32
  }
  func.func @transform_6(%arg0: i32) -> (i32, i32) {
    %c0_i32 = arith.constant 0 : i32
    %c0_i32_0 = arith.constant 0 : i32
    %c0_i32_1 = arith.constant 0 : i32
    return %c0_i32, %c0_i32_0 : i32, i32
  }
  func.func @transform_7(%arg0: i32) -> (i32, i32) {
    %c0_i32 = arith.constant 0 : i32
    %c0_i32_0 = arith.constant 0 : i32
    return %arg0, %c0_i32 : i32, i32
  }
}

</mosaic_0001>

<llo_original>
// kernel: custom_graph_linear_forward.1
$region0: #{custom_graph_linear_forward.1}
  #allocation0 [shape = 'u32[]', space=smem, size = 0x4, offset = 0x4, fixed_abs, tag = 'smem constant byte address 0x4 - core index']
  #allocation1 [shape = 'u32[144,128]{1,0:T(1,128)}', space=vmem, size = 0x12000, scoped, tag = 'internal scratch']
  %s0 = inlined_call_operand.vmem [shape: bf16[8,16], index: 0, kind: input, shape index: {}]
  %s1 = inlined_call_operand.vmem [shape: bf16[16,64], index: 1, kind: input, shape index: {}]
  %s2 = inlined_call_operand.vmem [shape: bf16[64,64], index: 2, kind: input, shape index: {}]
  %s3 = inlined_call_operand.hbm [shape: bf16[64,64], index: 3, kind: input, shape index: {}]
  %s4 = inlined_call_operand.vmem [shape: bf16[64,8], index: 4, kind: input, shape index: {}]
  %s5 = inlined_call_operand.vmem [shape: f32[3,64], index: 5, kind: input, shape index: {}]
  %s6 = inlined_call_operand.vmem [shape: f32[1,8], index: 6, kind: input, shape index: {}]
  %s7 = inlined_call_operand.hbm [shape: f32[8,8], index: 7, kind: output, shape index: {}]
  %s8 = sld [smem:[#allocation0]]
  $region42: #{custom_graph_linear_forward.1} parent=0
    _
  %s10 = ssub.s32 1, %s8
  %s11 = scalar_select 0, %s10, %s8
  $region1: #{custom_graph_linear_forward.1} parent=0
    #allocation2 [shape = 'u8[16384]{0}', space=vmem, size = 0x4000, scoped, tag = 'input window, operand 3, single buffered']
    #allocation3 [shape = 's32[1]{0}', space=sflag, size = 0x4, scoped, tag = 'scoped memory for custom_graph_linear_forward.1']
    #allocation4 [shape = 's32[1]{0}', space=sflag, size = 0x4, scoped, tag = 'scoped memory for custom_graph_linear_forward.1']
    #allocation5 [shape = 'u8[4096]{0}', space=vmem, size = 0x1000, scoped, tag = 'output window, operand 0, single buffered']
    %12 = vsyncpa [#allocation3], 0
    %13 = vsyncpa [#allocation4], 0
    // Predicated region
    $region2: #{custom_graph_linear_forward.1} parent=1 // pred_check
      _
    $region3: #{custom_graph_linear_forward.1} parent=1 // pred_check_branch
      %15 = sbr.rel (0) target = $region5
    $region4: #{custom_graph_linear_forward.1} parent=1 // pred_region
      _
    $region5: #{custom_graph_linear_forward.1} parent=1 // pred_fallthru
      _
    // Predicated region
    $region6: #{custom_graph_linear_forward.1} parent=1 // pred_check
      _
    $region7: #{custom_graph_linear_forward.1} parent=1 // pred_check_branch
      %17 = sbr.rel (0) target = $region9
    $region8: #{custom_graph_linear_forward.1} parent=1 // pred_region
      _
    $region9: #{custom_graph_linear_forward.1} parent=1 // pred_fallthru
      _
    // Predicated region
    $region10: #{custom_graph_linear_forward.1} parent=1 // pred_check
      _
    $region11: #{custom_graph_linear_forward.1} parent=1 // pred_check_branch
      %19 = sbr.rel (0) target = $region13
    $region12: #{custom_graph_linear_forward.1} parent=1 // pred_region
      _
    $region13: #{custom_graph_linear_forward.1} parent=1 // pred_fallthru
      _
    // Predicated region
    $region14: #{custom_graph_linear_forward.1} parent=1 // pred_check
      _
    $region15: #{custom_graph_linear_forward.1} parent=1 // pred_check_branch
      %21 = sbr.rel (0) target = $region17
    $region16: #{custom_graph_linear_forward.1} parent=1 // pred_region
      %s23 = ssub.s32 512, 512
      %24 = vsyncadd [#allocation3], %s23
      %s25 = sshll.u32 [#allocation2], 4
      %s26 = int_to_ptr.vmem [resolvable:$true] %s25
      %31 = dma.hbm_to_vmem [thread:$0]  %s3, 512, %s26, [#allocation3], 64, 64, 4
    $region17: #{custom_graph_linear_forward.1} parent=1 // pred_fallthru
      _
    // Predicated region
    $region18: #{custom_graph_linear_forward.1} parent=1 // pred_check
      _
    $region19: #{custom_graph_linear_forward.1} parent=1 // pred_check_branch
      %33 = sbr.rel (0) target = $region21
    $region20: #{custom_graph_linear_forward.1} parent=1 // pred_region
      _
    $region21: #{custom_graph_linear_forward.1} parent=1 // pred_fallthru
      _
    // Predicated region
    $region22: #{custom_graph_linear_forward.1} parent=1 // pred_check
      _
    $region23: #{custom_graph_linear_forward.1} parent=1 // pred_check_branch
      %35 = sbr.rel (0) target = $region25
    $region24: #{custom_graph_linear_forward.1} parent=1 // pred_region
      _
    $region25: #{custom_graph_linear_forward.1} parent=1 // pred_fallthru
      _
    // Predicated region
    $region26: #{custom_graph_linear_forward.1} parent=1 // pred_check
      _
    $region27: #{custom_graph_linear_forward.1} parent=1 // pred_check_branch
      %37 = sbr.rel (0) target = $region29
    $region28: #{custom_graph_linear_forward.1} parent=1 // pred_region
      _
    $region29: #{custom_graph_linear_forward.1} parent=1 // pred_fallthru
      _
    // Predicated region
    $region30: #{custom_graph_linear_forward.1} parent=1 // pred_check
      _
    $region31: #{custom_graph_linear_forward.1} parent=1 // pred_check_branch
      %39 = sbr.rel (0) target = $region33
    $region32: #{custom_graph_linear_forward.1} parent=1 // pred_region
      %40 = dma.done [#allocation3], 512
    $region33: #{custom_graph_linear_forward.1} parent=1 // pred_fallthru
      _
    %v42 = vld [vmem:[%s0] sm:$0xf]
    %v43 = vld [vmem:[%s1] sm:$0xf]
    %v44 = vld [vmem:[%s1 + $0x4] sm:$0xf]
    %v45 = vld [vmem:[%s5] sm:$0x1]
    %v46 = vlaneseq
    %v47 = vshrl.u32 %v46, 7
    %v48 = vsub.s32 0, %v47
    %v49 = vrot.slane %v45, %v48
    %v52 = vunpack.c.l.b16 %v43
    %v53 = vunpack.c.l.b16 %v44
    %v54 = vpack.c.b16 %v53, %v52
    %vm56 = vcmask 130048
    %v58 = vsel %vm56, %v42, 0
    %60 = vmatprep.subr.bf16.mxu0 0
    %61 = vmatpush1.bf16.msra.mxu0 %v54
    %62 = vmatprep.subr.bf16.mxu0 0
    %63 = vmatpush1.bf16.msra.mxu0 0
    %64 = vmatprep.subr.bf16.mxu0 0
    %65 = vmatpush1.bf16.msra.mxu0 0
    %66 = vmatprep.subr.bf16.mxu0 0
    %67 = vmatpush1.bf16.msra.mxu0 0
    %68 = vmatprep.subr.bf16.mxu0 0
    %69 = vmatpush1.bf16.msra.mxu0 0
    %70 = vmatprep.subr.bf16.mxu0 0
    %71 = vmatpush1.bf16.msra.mxu0 0
    %72 = vmatprep.subr.bf16.mxu0 0
    %73 = vmatpush1.bf16.msra.mxu0 0
    %74 = vmatprep.subr.bf16.mxu0 0
    %75 = vmatpush1.bf16.msra.mxu0 0
    %76 = vmatprep.subr.bf16.mxu0 0
    %77 = vmatpush1.bf16.msra.mxu0 0
    %78 = vmatprep.subr.bf16.mxu0 0
    %79 = vmatpush1.bf16.msra.mxu0 0
    %80 = vmatprep.subr.bf16.mxu0 0
    %81 = vmatpush1.bf16.msra.mxu0 0
    %82 = vmatprep.subr.bf16.mxu0 0
    %83 = vmatpush1.bf16.msra.mxu0 0
    %84 = vmatprep.subr.bf16.mxu0 0
    %85 = vmatpush1.bf16.msra.mxu0 0
    %86 = vmatprep.subr.bf16.mxu0 0
    %87 = vmatpush1.bf16.msra.mxu0 0
    %88 = vmatprep.subr.bf16.mxu0 0
    %89 = vmatpush1.bf16.msra.mxu0 0
    %90 = vmatprep.subr.bf16.mxu0 0
    %91 = vmatpush1.bf16.msra.mxu0 0
    %92 = vmatprep.mubr.bf16.mxu0 0
    %93 = vmatmul.mubr.bf16.gmra.mrb[0].mxu0 %v58
    %v94 = vpop.f32.mrb[0].mxu0
    %v95 = vadd.f32 %v49, %v94
    %v96 = vpop.f32.mrb[0].mxu0
    %v97 = vpop.f32.mrb[0].mxu0
    %v98 = vpop.f32.mrb[0].mxu0
    %99 = vdwg.mxu0
    %v100 = vmax.f32 %v95, 0.0
    %v101 = vpack.c.bf16 %v100, %v100
    %v102 = vld [vmem:[%s2] sm:$0xf]
    %v103 = vld [vmem:[%s2 + $0x4] sm:$0xf]
    %v104 = vld [vmem:[%s2 + $0x8] sm:$0xf]
    %v105 = vld [vmem:[%s2 + $0xc] sm:$0xf]
    %v106 = vld [vmem:[%s2 + $0x10] sm:$0xf]
    %v107 = vld [vmem:[%s2 + $0x14] sm:$0xf]
    %v108 = vld [vmem:[%s2 + $0x18] sm:$0xf]
    %v109 = vld [vmem:[%s2 + $0x1c] sm:$0xf]
    %v110 = vld [vmem:[%s5 + $0x1] sm:$0x1]
    %v111 = vlaneseq
    %v112 = vshrl.u32 %v111, 7
    %v113 = vsub.s32 0, %v112
    %v114 = vrot.slane %v110, %v113
    %v123 = vunpack.c.l.b16 %v102
    %v124 = vunpack.c.l.b16 %v103
    %v125 = vunpack.c.l.b16 %v104
    %v126 = vunpack.c.l.b16 %v105
    %v127 = vunpack.c.l.b16 %v106
    %v128 = vunpack.c.l.b16 %v107
    %v129 = vunpack.c.l.b16 %v108
    %v130 = vunpack.c.l.b16 %v109
    %v131 = vpack.c.b16 %v124, %v123
    %v132 = vpack.c.b16 %v126, %v125
    %v133 = vpack.c.b16 %v128, %v127
    %v134 = vpack.c.b16 %v130, %v129
    %vm139 = vcmask 523264
    %v141 = vsel %vm139, %v101, 0
    %143 = vmatprep.subr.bf16.mxu0 0
    %144 = vmatpush1.bf16.msra.mxu0 %v131
    %145 = vmatprep.subr.bf16.mxu0 0
    %146 = vmatpush1.bf16.msra.mxu0 %v132
    %147 = vmatprep.subr.bf16.mxu0 0
    %148 = vmatpush1.bf16.msra.mxu0 %v133
    %149 = vmatprep.subr.bf16.mxu0 0
    %150 = vmatpush1.bf16.msra.mxu0 %v134
    %151 = vmatprep.subr.bf16.mxu0 0
    %152 = vmatpush1.bf16.msra.mxu0 0
    %153 = vmatprep.subr.bf16.mxu0 0
    %154 = vmatpush1.bf16.msra.mxu0 0
    %155 = vmatprep.subr.bf16.mxu0 0
    %156 = vmatpush1.bf16.msra.mxu0 0
    %157 = vmatprep.subr.bf16.mxu0 0
    %158 = vmatpush1.bf16.msra.mxu0 0
    %159 = vmatprep.subr.bf16.mxu0 0
    %160 = vmatpush1.bf16.msra.mxu0 0
    %161 = vmatprep.subr.bf16.mxu0 0
    %162 = vmatpush1.bf16.msra.mxu0 0
    %163 = vmatprep.subr.bf16.mxu0 0
    %164 = vmatpush1.bf16.msra.mxu0 0
    %165 = vmatprep.subr.bf16.mxu0 0
    %166 = vmatpush1.bf16.msra.mxu0 0
    %167 = vmatprep.subr.bf16.mxu0 0
    %168 = vmatpush1.bf16.msra.mxu0 0
    %169 = vmatprep.subr.bf16.mxu0 0
    %170 = vmatpush1.bf16.msra.mxu0 0
    %171 = vmatprep.subr.bf16.mxu0 0
    %172 = vmatpush1.bf16.msra.mxu0 0
    %173 = vmatprep.subr.bf16.mxu0 0
    %174 = vmatpush1.bf16.msra.mxu0 0
    %175 = vmatprep.mubr.bf16.mxu0 0
    %176 = vmatmul.mubr.bf16.gmra.mrb[0].mxu0 %v141
    %v177 = vpop.f32.mrb[0].mxu0
    %v178 = vadd.f32 %v114, %v177
    %v179 = vpop.f32.mrb[0].mxu0
    %v180 = vpop.f32.mrb[0].mxu0
    %v181 = vpop.f32.mrb[0].mxu0
    %182 = vdwg.mxu0
    %v183 = vmax.f32 %v178, 0.0
    %v184 = vpack.c.bf16 %v183, %v183
    %v185 = vld [vmem:[#allocation2] sm:$0xf]
    %v186 = vld [vmem:[#allocation2 + $0x4] sm:$0xf]
    %v187 = vld [vmem:[#allocation2 + $0x8] sm:$0xf]
    %v188 = vld [vmem:[#allocation2 + $0xc] sm:$0xf]
    %v189 = vld [vmem:[#allocation2 + $0x10] sm:$0xf]
    %v190 = vld [vmem:[#allocation2 + $0x14] sm:$0xf]
    %v191 = vld [vmem:[#allocation2 + $0x18] sm:$0xf]
    %v192 = vld [vmem:[#allocation2 + $0x1c] sm:$0xf]
    %v193 = vld [vmem:[%s5 + $0x2] sm:$0x1]
    %v194 = vlaneseq
    %v195 = vshrl.u32 %v194, 7
    %v196 = vsub.s32 0, %v195
    %v197 = vrot.slane %v193, %v196
    %v206 = vunpack.c.l.b16 %v185
    %v207 = vunpack.c.l.b16 %v186
    %v208 = vunpack.c.l.b16 %v187
    %v209 = vunpack.c.l.b16 %v188
    %v210 = vunpack.c.l.b16 %v189
    %v211 = vunpack.c.l.b16 %v190
    %v212 = vunpack.c.l.b16 %v191
    %v213 = vunpack.c.l.b16 %v192
    %v214 = vpack.c.b16 %v207, %v206
    %v215 = vpack.c.b16 %v209, %v208
    %v216 = vpack.c.b16 %v211, %v210
    %v217 = vpack.c.b16 %v213, %v212
    %v223 = vsel %vm139, %v184, 0
    %225 = vmatprep.subr.bf16.mxu0 0
    %226 = vmatpush1.bf16.msra.mxu0 %v214
    %227 = vmatprep.subr.bf16.mxu0 0
    %228 = vmatpush1.bf16.msra.mxu0 %v215
    %229 = vmatprep.subr.bf16.mxu0 0
    %230 = vmatpush1.bf16.msra.mxu0 %v216
    %231 = vmatprep.subr.bf16.mxu0 0
    %232 = vmatpush1.bf16.msra.mxu0 %v217
    %233 = vmatprep.subr.bf16.mxu0 0
    %234 = vmatpush1.bf16.msra.mxu0 0
    %235 = vmatprep.subr.bf16.mxu0 0
    %236 = vmatpush1.bf16.msra.mxu0 0
    %237 = vmatprep.subr.bf16.mxu0 0
    %238 = vmatpush1.bf16.msra.mxu0 0
    %239 = vmatprep.subr.bf16.mxu0 0
    %240 = vmatpush1.bf16.msra.mxu0 0
    %241 = vmatprep.subr.bf16.mxu0 0
    %242 = vmatpush1.bf16.msra.mxu0 0
    %243 = vmatprep.subr.bf16.mxu0 0
    %244 = vmatpush1.bf16.msra.mxu0 0
    %245 = vmatprep.subr.bf16.mxu0 0
    %246 = vmatpush1.bf16.msra.mxu0 0
    %247 = vmatprep.subr.bf16.mxu0 0
    %248 = vmatpush1.bf16.msra.mxu0 0
    %249 = vmatprep.subr.bf16.mxu0 0
    %250 = vmatpush1.bf16.msra.mxu0 0
    %251 = vmatprep.subr.bf16.mxu0 0
    %252 = vmatpush1.bf16.msra.mxu0 0
    %253 = vmatprep.subr.bf16.mxu0 0
    %254 = vmatpush1.bf16.msra.mxu0 0
    %255 = vmatprep.subr.bf16.mxu0 0
    %256 = vmatpush1.bf16.msra.mxu0 0
    %257 = vmatprep.mubr.bf16.mxu0 0
    %258 = vmatmul.mubr.bf16.gmra.mrb[0].mxu0 %v223
    %v259 = vpop.f32.mrb[0].mxu0
    %v260 = vadd.f32 %v197, %v259
    %v261 = vpop.f32.mrb[0].mxu0
    %v262 = vpop.f32.mrb[0].mxu0
    %v263 = vpop.f32.mrb[0].mxu0
    %264 = vdwg.mxu0
    %v265 = vmax.f32 %v260, 0.0
    %v266 = vpack.c.bf16 %v265, %v265
    %v267 = vld [vmem:[%s4] sm:$0xf]
    %v268 = vld [vmem:[%s4 + $0x4] sm:$0xf]
    %v269 = vld [vmem:[%s4 + $0x8] sm:$0xf]
    %v270 = vld [vmem:[%s4 + $0xc] sm:$0xf]
    %v271 = vld [vmem:[%s4 + $0x10] sm:$0xf]
    %v272 = vld [vmem:[%s4 + $0x14] sm:$0xf]
    %v273 = vld [vmem:[%s4 + $0x18] sm:$0xf]
    %v274 = vld [vmem:[%s4 + $0x1c] sm:$0xf]
    %v275 = vld [vmem:[%s6] sm:$0x1]
    %v277 = vlaneseq
    %v278 = vshrl.u32 %v277, 7
    %v279 = vsub.s32 0, %v278
    %v280 = vrot.slane %v275, %v279
    %v290 = vunpack.c.l.b16 %v267
    %v291 = vunpack.c.l.b16 %v268
    %v292 = vunpack.c.l.b16 %v269
    %v293 = vunpack.c.l.b16 %v270
    %v294 = vunpack.c.l.b16 %v271
    %v295 = vunpack.c.l.b16 %v272
    %v296 = vunpack.c.l.b16 %v273
    %v297 = vunpack.c.l.b16 %v274
    %v298 = vpack.c.b16 %v291, %v290
    %v299 = vpack.c.b16 %v293, %v292
    %v300 = vpack.c.b16 %v295, %v294
    %v301 = vpack.c.b16 %v297, %v296
    %v307 = vsel %vm139, %v266, 0
    %309 = vmatprep.subr.bf16.mxu0 0
    %310 = vmatpush1.bf16.msra.mxu0 %v298
    %311 = vmatprep.subr.bf16.mxu0 0
    %312 = vmatpush1.bf16.msra.mxu0 %v299
    %313 = vmatprep.subr.bf16.mxu0 0
    %314 = vmatpush1.bf16.msra.mxu0 %v300
    %315 = vmatprep.subr.bf16.mxu0 0
    %316 = vmatpush1.bf16.msra.mxu0 %v301
    %317 = vmatprep.subr.bf16.mxu0 0
    %318 = vmatpush1.bf16.msra.mxu0 0
    %319 = vmatprep.subr.bf16.mxu0 0
    %320 = vmatpush1.bf16.msra.mxu0 0
    %321 = vmatprep.subr.bf16.mxu0 0
    %322 = vmatpush1.bf16.msra.mxu0 0
    %323 = vmatprep.subr.bf16.mxu0 0
    %324 = vmatpush1.bf16.msra.mxu0 0
    %325 = vmatprep.subr.bf16.mxu0 0
    %326 = vmatpush1.bf16.msra.mxu0 0
    %327 = vmatprep.subr.bf16.mxu0 0
    %328 = vmatpush1.bf16.msra.mxu0 0
    %329 = vmatprep.subr.bf16.mxu0 0
    %330 = vmatpush1.bf16.msra.mxu0 0
    %331 = vmatprep.subr.bf16.mxu0 0
    %332 = vmatpush1.bf16.msra.mxu0 0
    %333 = vmatprep.subr.bf16.mxu0 0
    %334 = vmatpush1.bf16.msra.mxu0 0
    %335 = vmatprep.subr.bf16.mxu0 0
    %336 = vmatpush1.bf16.msra.mxu0 0
    %337 = vmatprep.subr.bf16.mxu0 0
    %338 = vmatpush1.bf16.msra.mxu0 0
    %339 = vmatprep.subr.bf16.mxu0 0
    %340 = vmatpush1.bf16.msra.mxu0 0
    %341 = vmatprep.mubr.bf16.mxu0 0
    %342 = vmatmul.mubr.bf16.gmra.mrb[0].mxu0 %v307
    %v343 = vpop.f32.mrb[0].mxu0
    %v344 = vadd.f32 %v280, %v343
    %v345 = vpop.f32.mrb[0].mxu0
    %v346 = vpop.f32.mrb[0].mxu0
    %v347 = vpop.f32.mrb[0].mxu0
    %348 = vdwg.mxu0
    %vm349 = vcmask 64512
    %v350 = vsel %vm349, %v344, -inf
    %351 = vmax.xlane.f32.xlu0 %v350
    %v352 = vpop.xlane.xlu0 %351
    %v353 = vsub.f32 %v344, %v352
    %v354 = vmul.f32 %v353, 1.442695
    %v355 = vpow.pop %v354
    %v356 = vsel %vm349, %v355, 0.0
    %357 = vadd.xlane.f32.xlu0 %v356
    %v358 = vpop.xlane.xlu0 %357
    %v359 = vlog2.pop %v358
    %v360 = vmul.f32 %v359, 0.6931472
    %v361 = vsub.f32 %v353, %v360
    %362 = vst.msk [vmem:[#allocation5] sm:$0xff] %vm349, %v361
    // Predicated region
    $region34: #{custom_graph_linear_forward.1} parent=1 // pred_check
      _
    $region35: #{custom_graph_linear_forward.1} parent=1 // pred_check_branch
      %364 = sbr.rel (0) target = $region37
    $region36: #{custom_graph_linear_forward.1} parent=1 // pred_region
      %s366 = ssub.s32 128, 128
      %367 = vsyncadd [#allocation4], %s366
      %s369 = sshll.u32 [#allocation5], 4
      %s370 = int_to_ptr.vmem [resolvable:$true] %s369
      %372 = dma.vmem_to_hbm [thread:$0]  %s370, 128, %s7, [#allocation4]
    $region37: #{custom_graph_linear_forward.1} parent=1 // pred_fallthru
      _
    // Predicated region
    $region38: #{custom_graph_linear_forward.1} parent=1 // pred_check
      _
    $region39: #{custom_graph_linear_forward.1} parent=1 // pred_check_branch
      %374 = sbr.rel (0) target = $region41
    $region40: #{custom_graph_linear_forward.1} parent=1 // pred_region
      %375 = dma.done [#allocation4], 128
    $region41: #{custom_graph_linear_forward.1} parent=1 // pred_fallthru
      _
    %376 = vsyncpa [#allocation3], 1
    %377 = vsyncpa [#allocation4], 1

</llo_original>
